<compile_context>
chip_gen: v7x
topology: tpu7x:2x2x1
jax: 0.10.0
libtpu: 0.0.40
codegen_flags: <defaults>
</compile_context>

<pallas_src>
import functools

import jax
import jax.numpy as jnp
from jax import lax
from jax.experimental import pallas as pl
from jax.experimental.pallas import tpu as pltpu


_CHUNK = 128            # lanes per accumulation chunk (one f32 vreg width)
_CHUNKS_PER_ITER = 4    # chunks folded per inner iteration (breaks dep chains)


def _tree_sum(parts):
    """Pairwise tree add of a Python list of arrays (short dep chains)."""
    parts = list(parts)
    while len(parts) > 1:
        nxt = [parts[i] + parts[i + 1] for i in range(0, len(parts) - 1, 2)]
        if len(parts) % 2:
            nxt.append(parts[-1])
        parts = nxt
    return parts[0]


def _dice_partial_kernel(p_ref, t_ref, num_ref, den_ref, *,
                         p_pow, tile, d_true, ragged):
    """Accumulate per-row, per-lane partial sums of p*t and p**p + t**p.

    Grid: (core_split, row_blocks, steps); the trailing axis is the feature
    reduction.  Outputs are (1, row_block, 128) f32 accumulators carried
    across the trailing axis; the cheap cross-lane reduce happens in the JAX
    epilogue, so the steady state is pure VPU adds + DMA.
    """
    h = pl.program_id(0)          # feature-reduction split across cores
    k = pl.program_id(2)          # trailing ("arbitrary") reduction axis

    @pl.when(k == 0)
    def _init():
        num_ref[...] = jnp.zeros_like(num_ref)
        den_ref[...] = jnp.zeros_like(den_ref)

    row_blk = p_ref.shape[0]
    n_chunks = tile // _CHUNK

    if ragged:
        # Hoisted once per step; per-chunk masking is scalar-add + cmp + select.
        lane_ids = lax.broadcasted_iota(jnp.int32, (row_blk, _CHUNK), 1)
        # Global feature offset of this tile.
        col0 = (h * pl.num_programs(2) + k) * tile

    def load_chunk(lo):
        """lo = lane offset inside the tile (multiple of 128; int or traced)."""
        if isinstance(lo, int):
            idx = pl.ds(lo, _CHUNK)
        else:
            idx = pl.ds(pl.multiple_of(lo, _CHUNK), _CHUNK)
        pred = p_ref[:, idx].astype(jnp.float32)
        targ = t_ref[:, idx].astype(jnp.float32)
        if ragged:
            # Zero lanes past the true feature length (stale VMEM out there).
            valid = (lane_ids + (col0 + lo)) < d_true
            pred = jnp.where(valid, pred, 0.0)
            targ = jnp.where(valid, targ, 0.0)
        # den term pre-summed -> only one dependent add hits the carry later.
        return pred * targ, pred ** p_pow + targ ** p_pow

    def super_chunk(base):
        nparts, dparts = [], []
        for c in range(_CHUNKS_PER_ITER):
            dn, dd = load_chunk(base + c * _CHUNK)
            nparts.append(dn)
            dparts.append(dd)
        return _tree_sum(nparts), _tree_sum(dparts)

    num_acc = num_ref[0]          # (row_blk, 128) f32, carried across k
    den_acc = den_ref[0]

    n_super = n_chunks // _CHUNKS_PER_ITER
    if n_super > 4:
        # Big tiles: rolled loop with moderate unroll instead of a huge static
        # unroll (bounded live ranges -> no vreg spills, faster compile).
        def body(j, carry):
            na, da = carry
            dn, dd = super_chunk(j * (_CHUNKS_PER_ITER * _CHUNK))
            return na + dn, da + dd
        num_acc, den_acc = lax.fori_loop(0, n_super, body,
                                         (num_acc, den_acc), unroll=4)
    else:
        for j in range(n_super):
            dn, dd = super_chunk(j * (_CHUNKS_PER_ITER * _CHUNK))
            num_acc = num_acc + dn
            den_acc = den_acc + dd
    # Leftover chunks (statically known; fewer than _CHUNKS_PER_ITER of them).
    for c in range(n_super * _CHUNKS_PER_ITER, n_chunks):
        dn, dd = load_chunk(c * _CHUNK)
        num_acc = num_acc + dn
        den_acc = den_acc + dd

    num_ref[0] = num_acc
    den_ref[0] = den_acc


def _hw_params():
    """Generation-aware budgets; conservative (v7x-safe) fallback."""
    vmem_cap = None
    try:
        vmem_cap = getattr(pltpu.get_tpu_info(), "vmem_capacity_bytes", None)
    except Exception:
        vmem_cap = None
    n_cores = 1
    try:
        if "v7" in jax.devices()[0].device_kind.lower():
            n_cores = 2               # v7x: 2 TensorCores per chip
    except Exception:
        pass
    if n_cores == 1 and vmem_cap is not None and vmem_cap >= (100 << 20):
        # v5e / v6e: 128 MiB physical VMEM, single TensorCore -> go big.
        return dict(n_cores=1, max_tile=65536,
                    vmem_budget=48 << 20, vmem_limit=64 << 20)
    # v7x (64 MiB VMEM per TC) or unknown generation: stay conservative.
    return dict(n_cores=n_cores, max_tile=32768,
                vmem_budget=24 << 20, vmem_limit=32 << 20)


def _plan(d, rows, *, n_cores, max_tile, vmem_budget):
    """Pick (tile, row_block, par, steps).

    tile % 128 == 0; par*steps tiles cover d with at most one partial (never
    fully empty) trailing tile; the double-buffered 2-input footprint
    (16 * row_block * tile bytes) stays under vmem_budget.
    """
    cdiv = lambda a, b: -(-a // b)

    # Row blocking for large batches so the per-step working set and the
    # (row_block, 128) accumulator vreg pressure stay bounded.
    row_block = rows
    if rows > 64:
        for cand in (64, 32, 16, 8):
            if rows % cand == 0:
                row_block = cand
                break

    cap = max(128, min(max_tile, (vmem_budget // (16 * row_block)) // 128 * 128))
    tile = min(cap, cdiv(d, 128) * 128)
    n_tiles = cdiv(d, tile)

    par = 1
    if n_cores >= 2 and n_tiles >= 2:
        # v7x only: shrink the tile in 128-lane steps until the tile count is
        # even, so both cores get equal steps and no tile is fully OOB.
        t, nt = tile, n_tiles
        while nt % 2 and t > 128:
            t -= 128
            nt = cdiv(d, t)
        if nt % 2 == 0:
            tile, n_tiles, par = t, nt, 2
    steps = n_tiles // par
    return tile, row_block, par, steps


def binary_dice_loss(predict, target, smooth=1.0, p=2, reduction="mean"):
    """predict/target: shape [N, *].  Matches BinaryDiceLoss.forward.

    Inputs may be f32, bf16 or int8 — the kernel upcasts per chunk and
    accumulates in f32 (reduced-precision inputs halve HBM traffic).
    """
    assert predict.shape[0] == target.shape[0], "batch size mismatch"
    assert p > 0, "p must be > 0 (0**0 == 1 would corrupt masked lanes)"
    n = predict.shape[0]
    pred2d = predict.reshape(n, -1)
    targ2d = target.reshape(n, -1)
    d_full = pred2d.shape[1]

    # Sublane packing: with N < 8 only N of 8 sublanes per f32 vreg would carry
    # data.  Split each row into `rpb` contiguous sub-rows (exact row-major
    # reshape); per-sub-row sums are recombined in the epilogue.
    rpb = 1
    if n < 8:
        for cand in (8, 4, 2):
            if d_full % cand == 0:
                rpb = cand
                break
    rows = n * rpb
    d = d_full // rpb
    pred2d = pred2d.reshape(rows, d)
    targ2d = targ2d.reshape(rows, d)

    hw = _hw_params()
    tile, row_block, par, steps = _plan(
        d, rows, n_cores=hw["n_cores"],
        max_tile=hw["max_tile"], vmem_budget=hw["vmem_budget"])
    row_blocks = rows // row_block
    ragged = (d % tile) != 0      # handled in-kernel by masking (no pad copy)

    kernel = functools.partial(_dice_partial_kernel, p_pow=p, tile=tile,
                               d_true=d, ragged=ragged)

    if par > 1:
        # v7x: bind the feature-reduction split to the two TensorCores.
        dims = (pltpu.CORE_PARALLEL, pltpu.PARALLEL, pltpu.ARBITRARY)
    else:
        dims = ("parallel", "parallel", "arbitrary")

    in_spec = pl.BlockSpec((row_block, tile),
                           lambda h, r, k: (r, h * steps + k))
    out_spec = pl.BlockSpec((1, row_block, 128), lambda h, r, k: (h, r, 0))

    num_part, den_part = pl.pallas_call(
        kernel,
        out_shape=(
            jax.ShapeDtypeStruct((par, rows, 128), jnp.float32),
            jax.ShapeDtypeStruct((par, rows, 128), jnp.float32),
        ),
        grid_spec=pltpu.PrefetchScalarGridSpec(
            num_scalar_prefetch=0,
            grid=(par, row_blocks, steps),
            in_specs=[in_spec, in_spec],
            out_specs=(out_spec, out_spec),
        ),
        compiler_params=pltpu.CompilerParams(
            dimension_semantics=dims,
            vmem_limit_bytes=hw["vmem_limit"],
        ),
    )(pred2d, targ2d)

    # Tiny epilogue in plain JAX (a few KB of data; negligible cost).
    num = num_part.reshape(par, n, rpb * 128).sum(axis=(0, 2)) + smooth
    den = den_part.reshape(par, n, rpb * 128).sum(axis=(0, 2)) + smooth
    loss = 1.0 - num / den        # (N,) per-batch dice loss
    if reduction == "mean":
        return loss.mean()
    elif reduction == "sum":
        return loss.sum()
    elif reduction == "none":
        return loss
    raise Exception("Unexpected reduction {}".format(reduction))


def _reference(predict, target, smooth=1.0, p=2):
    n = predict.shape[0]
    pred = predict.reshape(n, -1).astype(jnp.float32)
    targ = target.reshape(n, -1).astype(jnp.float32)
    num = jnp.sum(pred * targ, axis=1) + smooth
    den = jnp.sum(pred ** p + targ ** p, axis=1) + smooth
    return jnp.mean(1.0 - num / den)


if __name__ == "__main__":
    key = jax.random.PRNGKey(0)
    k1, k2, k3, k4, k5, k6 = jax.random.split(key, 6)

    # Case 1: NCHW inputs at the module's natural small shape.
    predict = jax.nn.sigmoid(jax.random.normal(k1, (2, 4, 16, 16), jnp.float32))
    target = (jax.random.uniform(k2, (2, 4, 16, 16)) > 0.5).astype(jnp.float32)
    loss = binary_dice_loss(predict, target)
    jax.block_until_ready(loss)
    ref = _reference(predict, target)
    assert jnp.allclose(loss, ref, atol=1e-5, rtol=1e-4), (loss, ref)

    # Case 2: larger feature dim -> big-tile fori_loop reduction path.
    p2 = jax.nn.sigmoid(jax.random.normal(k3, (2, 4, 256, 256), jnp.float32))
    t2 = (jax.random.uniform(k4, (2, 4, 256, 256)) > 0.5).astype(jnp.float32)
    loss2 = binary_dice_loss(p2, t2)
    jax.block_until_ready(loss2)
    ref2 = _reference(p2, t2)
    assert jnp.allclose(loss2, ref2, atol=1e-5, rtol=1e-4), (loss2, ref2)

    # Case 3: ragged feature dim (not a multiple of 128) -> in-kernel masking
    # path, no host-side jnp.pad HBM copies.
    p3 = jax.nn.sigmoid(jax.random.normal(k5, (3, 3, 7, 11), jnp.float32))
    t3 = (jax.random.uniform(k6, (3, 3, 7, 11)) > 0.5).astype(jnp.float32)
    loss3 = binary_dice_loss(p3, t3)
    jax.block_until_ready(loss3)
    ref3 = _reference(p3, t3)
    assert jnp.allclose(loss3, ref3, atol=1e-5, rtol=1e-4), (loss3, ref3)

    # Case 4: bf16 inputs (half the HBM bytes); f32 accumulation in-kernel.
    p4 = p2.astype(jnp.bfloat16)
    t4 = t2.astype(jnp.bfloat16)
    loss4 = binary_dice_loss(p4, t4)
    jax.block_until_ready(loss4)
    ref4 = _reference(p4, t4)
    assert jnp.allclose(loss4, ref4, atol=1e-4, rtol=1e-3), (loss4, ref4)

    print("KERNEL_OK")
</pallas_src>

<mosaic_0001>
module attributes {stable_mosaic.version = 11 : i64} {
  func.func @_dice_partial_kernel(%arg0: i32, %arg1: i32, %arg2: i32, %arg3: memref<16x128xf32, #tpu.memory_space<vmem>>, %arg4: memref<16x128xf32, #tpu.memory_space<vmem>>, %arg5: memref<1x16x128xf32, #tpu.memory_space<vmem>>, %arg6: memref<1x16x128xf32, #tpu.memory_space<vmem>>) attributes {dimension_semantics = [#tpu.dimension_semantics<parallel>, #tpu.dimension_semantics<parallel>, #tpu.dimension_semantics<arbitrary>], iteration_bounds = array<i64: 1, 1, 1>, scalar_prefetch = 0 : i64, scratch_operands = 0 : i64, tpu.core_type = #tpu.core_type<tc>, window_params = [{transform_indices = @transform_0, window_bounds = array<i64: 16, 128>}, {transform_indices = @transform_1, window_bounds = array<i64: 16, 128>}, {transform_indices = @transform_2, window_bounds = array<i64: 1, 16, 128>}, {transform_indices = @transform_3, window_bounds = array<i64: 1, 16, 128>}]} {
    %c0_i32 = arith.constant 0 : i32
    %0 = arith.cmpi eq, %arg2, %c0_i32 : i32
    %1 = arith.extui %0 : i1 to i32
    %c0_i32_0 = arith.constant 0 : i32
    %2 = arith.cmpi ne, %1, %c0_i32_0 : i32
    scf.if %2 {
      %cst = arith.constant 0.000000e+00 : f32
      %21 = vector.broadcast %cst : f32 to vector<1x16x128xf32>
      %c0_16 = arith.constant 0 : index
      %c0_17 = arith.constant 0 : index
      %c0_18 = arith.constant 0 : index
      %22 = vector.load %arg5[%c0_16, %c0_17, %c0_18] : memref<1x16x128xf32, #tpu.memory_space<vmem>>, vector<1x16x128xf32>
      tpu.vector_store %arg5[%c0_16, %c0_17, %c0_18], %21 {strides = array<i32>} : memref<1x16x128xf32, #tpu.memory_space<vmem>>, vector<1x16x128xf32>,
      %cst_19 = arith.constant 0.000000e+00 : f32
      %23 = vector.broadcast %cst_19 : f32 to vector<1x16x128xf32>
      %c0_20 = arith.constant 0 : index
      %c0_21 = arith.constant 0 : index
      %c0_22 = arith.constant 0 : index
      %24 = vector.load %arg6[%c0_20, %c0_21, %c0_22] : memref<1x16x128xf32, #tpu.memory_space<vmem>>, vector<1x16x128xf32>
      tpu.vector_store %arg6[%c0_20, %c0_21, %c0_22], %23 {strides = array<i32>} : memref<1x16x128xf32, #tpu.memory_space<vmem>>, vector<1x16x128xf32>,
    } else {
    }
    %c0 = arith.constant 0 : index
    %c0_1 = arith.constant 0 : index
    %c0_2 = arith.constant 0 : index
    %3 = vector.load %arg5[%c0, %c0_1, %c0_2] : memref<1x16x128xf32, #tpu.memory_space<vmem>>, vector<1x16x128xf32>
    %4 = vector.shape_cast %3 : vector<1x16x128xf32> to vector<16x128xf32>
    %c0_3 = arith.constant 0 : index
    %c0_4 = arith.constant 0 : index
    %c0_5 = arith.constant 0 : index
    %5 = vector.load %arg6[%c0_3, %c0_4, %c0_5] : memref<1x16x128xf32, #tpu.memory_space<vmem>>, vector<1x16x128xf32>
    %6 = vector.shape_cast %5 : vector<1x16x128xf32> to vector<16x128xf32>
    %c0_6 = arith.constant 0 : index
    %c0_7 = arith.constant 0 : index
    %7 = vector.load %arg3[%c0_6, %c0_7] : memref<16x128xf32, #tpu.memory_space<vmem>>, vector<16x128xf32>
    %c0_8 = arith.constant 0 : index
    %c0_9 = arith.constant 0 : index
    %8 = vector.load %arg4[%c0_8, %c0_9] : memref<16x128xf32, #tpu.memory_space<vmem>>, vector<16x128xf32>
    %9 = arith.mulf %7, %8 : vector<16x128xf32>
    %10 = arith.mulf %7, %7 : vector<16x128xf32>
    %11 = arith.mulf %8, %8 : vector<16x128xf32>
    %12 = arith.addf %10, %11 : vector<16x128xf32>
    %13 = arith.addf %4, %9 : vector<16x128xf32>
    %14 = arith.addf %6, %12 : vector<16x128xf32>
    %c0_10 = arith.constant 0 : index
    %c0_11 = arith.constant 0 : index
    %c0_12 = arith.constant 0 : index
    %15 = vector.load %arg5[%c0_10, %c0_11, %c0_12] : memref<1x16x128xf32, #tpu.memory_space<vmem>>, vector<1x16x128xf32>
    %16 = vector.shape_cast %15 : vector<1x16x128xf32> to vector<16x128xf32>
    %17 = vector.shape_cast %13 : vector<16x128xf32> to vector<1x16x128xf32>
    tpu.vector_store %arg5[%c0_10, %c0_11, %c0_12], %17 {strides = array<i32>} : memref<1x16x128xf32, #tpu.memory_space<vmem>>, vector<1x16x128xf32>,
    %c0_13 = arith.constant 0 : index
    %c0_14 = arith.constant 0 : index
    %c0_15 = arith.constant 0 : index
    %18 = vector.load %arg6[%c0_13, %c0_14, %c0_15] : memref<1x16x128xf32, #tpu.memory_space<vmem>>, vector<1x16x128xf32>
    %19 = vector.shape_cast %18 : vector<1x16x128xf32> to vector<16x128xf32>
    %20 = vector.shape_cast %14 : vector<16x128xf32> to vector<1x16x128xf32>
    tpu.vector_store %arg6[%c0_13, %c0_14, %c0_15], %20 {strides = array<i32>} : memref<1x16x128xf32, #tpu.memory_space<vmem>>, vector<1x16x128xf32>,
    return
  }
  func.func @transform_0(%arg0: i32, %arg1: i32, %arg2: i32) -> (i32, i32) {
    %c1_i32 = arith.constant 1 : i32
    %0 = arith.muli %arg0, %c1_i32 : i32
    %1 = arith.addi %0, %arg2 : i32
    %c0_i32 = arith.constant 0 : i32
    return %arg1, %1 : i32, i32
  }
  func.func @transform_1(%arg0: i32, %arg1: i32, %arg2: i32) -> (i32, i32) {
    %c1_i32 = arith.constant 1 : i32
    %0 = arith.muli %arg0, %c1_i32 : i32
    %1 = arith.addi %0, %arg2 : i32
    %c0_i32 = arith.constant 0 : i32
    return %arg1, %1 : i32, i32
  }
  func.func @transform_2(%arg0: i32, %arg1: i32, %arg2: i32) -> (i32, i32, i32) {
    %c0_i32 = arith.constant 0 : i32
    %c0_i32_0 = arith.constant 0 : i32
    return %arg0, %arg1, %c0_i32 : i32, i32, i32
  }
  func.func @transform_3(%arg0: i32, %arg1: i32, %arg2: i32) -> (i32, i32, i32) {
    %c0_i32 = arith.constant 0 : i32
    %c0_i32_0 = arith.constant 0 : i32
    return %arg0, %arg1, %c0_i32 : i32, i32, i32
  }
}

</mosaic_0001>

<llo_original>
// kernel: tpu_custom_call.1
$region0: #{tpu_custom_call.1}
  #allocation0 [shape = 'u32[]', space=smem, size = 0x4, offset = 0x4, fixed_abs, tag = 'smem constant byte address 0x4 - core index']
  #allocation1 [shape = 'u32[144,128]{1,0:T(1,128)}', space=vmem, size = 0x12000, scoped, tag = 'internal scratch']
  %s0 = inlined_call_operand.hbm [shape: f32[16,128], index: 0, kind: input, shape index: {}]
  %s1 = inlined_call_operand.hbm [shape: f32[16,128], index: 1, kind: input, shape index: {}]
  %s2 = inlined_call_operand.hbm [shape: f32[1,16,128], index: 2, kind: output, shape index: {0}]
  %s3 = inlined_call_operand.hbm [shape: f32[1,16,128], index: 3, kind: output, shape index: {1}]
  %4 = xla_tuple %s2, %s3
  %s5 = sld [smem:[#allocation0]]
  $region38: #{tpu_custom_call.1} parent=0
    _
  %s7 = ssub.s32 1, %s5
  %s8 = scalar_select 0, %s7, %s5
  $region1: #{tpu_custom_call.1} parent=0
    #allocation2 [shape = 'u8[8192]{0}', space=vmem, size = 0x2000, scoped, tag = 'input window, operand 0, single buffered']
    #allocation3 [shape = 's32[1]{0}', space=sflag, size = 0x4, scoped, tag = 'scoped memory for tpu_custom_call.1']
    #allocation4 [shape = 's32[1]{0}', space=sflag, size = 0x4, scoped, tag = 'scoped memory for tpu_custom_call.1']
    #allocation5 [shape = 'u8[8192]{0}', space=vmem, size = 0x2000, scoped, tag = 'input window, operand 1, single buffered']
    #allocation6 [shape = 's32[1]{0}', space=sflag, size = 0x4, scoped, tag = 'scoped memory for tpu_custom_call.1']
    #allocation7 [shape = 'u8[8192]{0}', space=vmem, size = 0x2000, scoped, tag = 'output window, operand 0, single buffered']
    #allocation8 [shape = 'u8[8192]{0}', space=vmem, size = 0x2000, scoped, tag = 'output window, operand 1, single buffered']
    #allocation9 [shape = 's32[1]{0}', space=sflag, size = 0x4, scoped, tag = 'scoped memory for tpu_custom_call.1']
    %9 = vsyncpa [#allocation3], 0
    %10 = vsyncpa [#allocation6], 0
    %11 = vsyncpa [#allocation4], 0
    %12 = vsyncpa [#allocation9], 0
    // Predicated region
    $region2: #{tpu_custom_call.1} parent=1 // pred_check
      _
    $region3: #{tpu_custom_call.1} parent=1 // pred_check_branch
      %14 = sbr.rel (0) target = $region5
    $region4: #{tpu_custom_call.1} parent=1 // pred_region
      %s15 = sadd.s32 0, 0
      %s17 = ssub.s32 256, 256
      %18 = vsyncadd [#allocation3], %s17
      %s19 = smul.addr %s15, 128
      %s20 = scalar_lea.hbm %s0, %s19
      %s21 = sshll.u32 [#allocation2], 4
      %s22 = int_to_ptr.vmem [resolvable:$true] %s21
      %27 = dma.hbm_to_vmem [thread:$0]  %s20, 256, %s22, [#allocation3], 128, 128, 8
    $region5: #{tpu_custom_call.1} parent=1 // pred_fallthru
      _
    // Predicated region
    $region6: #{tpu_custom_call.1} parent=1 // pred_check
      _
    $region7: #{tpu_custom_call.1} parent=1 // pred_check_branch
      %29 = sbr.rel (0) target = $region9
    $region8: #{tpu_custom_call.1} parent=1 // pred_region
      %s30 = sadd.s32 0, 0
      %s32 = ssub.s32 256, 256
      %33 = vsyncadd [#allocation6], %s32
      %s34 = smul.addr %s30, 128
      %s35 = scalar_lea.hbm %s1, %s34
      %s36 = sshll.u32 [#allocation5], 4
      %s37 = int_to_ptr.vmem [resolvable:$true] %s36
      %42 = dma.hbm_to_vmem [thread:$0]  %s35, 256, %s37, [#allocation6], 128, 128, 8
    $region9: #{tpu_custom_call.1} parent=1 // pred_fallthru
      _
    // Predicated region
    $region10: #{tpu_custom_call.1} parent=1 // pred_check
      _
    $region11: #{tpu_custom_call.1} parent=1 // pred_check_branch
      %44 = sbr.rel (0) target = $region13
    $region12: #{tpu_custom_call.1} parent=1 // pred_region
      %45 = dma.done [#allocation3], 256
    $region13: #{tpu_custom_call.1} parent=1 // pred_fallthru
      _
    // Predicated region
    $region14: #{tpu_custom_call.1} parent=1 // pred_check
      _
    $region15: #{tpu_custom_call.1} parent=1 // pred_check_branch
      %47 = sbr.rel (0) target = $region17
    $region16: #{tpu_custom_call.1} parent=1 // pred_region
      %48 = dma.done [#allocation6], 256
    $region17: #{tpu_custom_call.1} parent=1 // pred_fallthru
      _
    %s49 = sadd.s32 0, 0
    %s50 = sadd.s32 0, 0
    %p51 = scmp.eq.s32.totalorder 0, 0
    // Predicated region
    $region18: #{tpu_custom_call.1} parent=1 // pred_check
      %p52 = pneg %p51
    $region19: #{tpu_custom_call.1} parent=1 // pred_check_branch
      %54 = sbr.rel (%p52) target = $region21
    $region20: #{tpu_custom_call.1} parent=1 // pred_region
      %55 = vst [vmem:[#allocation7] sm:$0xff] 0.0
      %56 = vst [vmem:[#allocation7 + $0x8] sm:$0xff] 0.0
      %57 = vst [vmem:[#allocation8] sm:$0xff] 0.0
      %58 = vst [vmem:[#allocation8 + $0x8] sm:$0xff] 0.0
    $region21: #{tpu_custom_call.1} parent=1 // pred_fallthru
      _
    %v59 = vld [vmem:[#allocation7] sm:$0xff]
    %v60 = vld [vmem:[#allocation7 + $0x8] sm:$0xff]
    %v61 = vld [vmem:[#allocation8] sm:$0xff]
    %v62 = vld [vmem:[#allocation8 + $0x8] sm:$0xff]
    %v63 = vld [vmem:[#allocation2] sm:$0xff]
    %v64 = vld [vmem:[#allocation2 + $0x8] sm:$0xff]
    %v65 = vld [vmem:[#allocation5] sm:$0xff]
    %v66 = vld [vmem:[#allocation5 + $0x8] sm:$0xff]
    %v67 = vmul.f32 %v63, %v65
    %v68 = vmul.f32 %v64, %v66
    %v69 = vmul.f32 %v63, %v63
    %v70 = vmul.f32 %v64, %v64
    %v71 = vmul.f32 %v65, %v65
    %v72 = vmul.f32 %v66, %v66
    %v73 = vadd.f32 %v69, %v71
    %v74 = vadd.f32 %v70, %v72
    %v75 = vadd.f32 %v59, %v67
    %v76 = vadd.f32 %v60, %v68
    %v77 = vadd.f32 %v61, %v73
    %v78 = vadd.f32 %v62, %v74
    %79 = vst [vmem:[#allocation7] sm:$0xff] %v75
    %80 = vst [vmem:[#allocation7 + $0x8] sm:$0xff] %v76
    %81 = vst [vmem:[#allocation8] sm:$0xff] %v77
    %82 = vst [vmem:[#allocation8 + $0x8] sm:$0xff] %v78
    // Predicated region
    $region22: #{tpu_custom_call.1} parent=1 // pred_check
      _
    $region23: #{tpu_custom_call.1} parent=1 // pred_check_branch
      %84 = sbr.rel (0) target = $region25
    $region24: #{tpu_custom_call.1} parent=1 // pred_region
      %s86 = ssub.s32 256, 256
      %87 = vsyncadd [#allocation4], %s86
      %s88 = sshll.u32 [#allocation7], 4
      %s89 = int_to_ptr.vmem [resolvable:$true] %s88
      %94 = dma.vmem_to_hbm [thread:$0]  %s89, 256, %s2, [#allocation4], 128, 128, 8
    $region25: #{tpu_custom_call.1} parent=1 // pred_fallthru
      _
    // Predicated region
    $region26: #{tpu_custom_call.1} parent=1 // pred_check
      _
    $region27: #{tpu_custom_call.1} parent=1 // pred_check_branch
      %96 = sbr.rel (0) target = $region29
    $region28: #{tpu_custom_call.1} parent=1 // pred_region
      %s98 = ssub.s32 256, 256
      %99 = vsyncadd [#allocation9], %s98
      %s100 = sshll.u32 [#allocation8], 4
      %s101 = int_to_ptr.vmem [resolvable:$true] %s100
      %106 = dma.vmem_to_hbm [thread:$0]  %s101, 256, %s3, [#allocation9], 128, 128, 8
    $region29: #{tpu_custom_call.1} parent=1 // pred_fallthru
      _
    // Predicated region
    $region30: #{tpu_custom_call.1} parent=1 // pred_check
      _
    $region31: #{tpu_custom_call.1} parent=1 // pred_check_branch
      %108 = sbr.rel (0) target = $region33
    $region32: #{tpu_custom_call.1} parent=1 // pred_region
      %109 = dma.done [#allocation4], 256
    $region33: #{tpu_custom_call.1} parent=1 // pred_fallthru
      _
    // Predicated region
    $region34: #{tpu_custom_call.1} parent=1 // pred_check
      _
    $region35: #{tpu_custom_call.1} parent=1 // pred_check_branch
      %111 = sbr.rel (0) target = $region37
    $region36: #{tpu_custom_call.1} parent=1 // pred_region
      %112 = dma.done [#allocation9], 256
    $region37: #{tpu_custom_call.1} parent=1 // pred_fallthru
      _
    %113 = vsyncpa [#allocation3], 1
    %114 = vsyncpa [#allocation6], 1
    %115 = vsyncpa [#allocation4], 1
    %116 = vsyncpa [#allocation9], 1

</llo_original>
